<compile_context>
chip_gen: v5e
topology: v5e:2x2
jax: 0.10.0
libtpu: 0.0.40
codegen_flags: <defaults>
</compile_context>

<pallas_src>
import jax
import jax.numpy as jnp
from jax.experimental import pallas as pl
from jax.experimental.pallas import tpu as pltpu


HIDDEN = 256   # fc1 width from the PyTorch module
LANE = 128     # TPU lane width


def _round_up(n, m):
    return ((n + m - 1) // m) * m


def policy_kernel(x_ref, w1_ref, b1_ref, w2_ref, b2_ref, o_ref):
    # layer 1: relu(x @ W1 + b1)  — bf16 operands into the MXU, f32 accumulate
    x = x_ref[...].astype(jnp.bfloat16)
    h1 = jnp.dot(x, w1_ref[...], preferred_element_type=jnp.float32)
    h1 = jnp.maximum(h1 + b1_ref[...], 0.0)

    # layer 2: h1 @ W2 + b2  (W2 / output padded to a lane multiple)
    logits = jnp.dot(h1.astype(jnp.bfloat16), w2_ref[...],
                     preferred_element_type=jnp.float32)
    o_ref[...] = logits + b2_ref[...]


def init_params(key, input_dim, output_dim):
    """f32 master params mimicking PyTorch nn.Linear default init,
    stored as (in_features, out_features) so y = x @ W + b."""
    def linear(k, fan_in, fan_out):
        kw, kb = jax.random.split(k)
        bound = 1.0 / jnp.sqrt(fan_in)
        w = jax.random.uniform(kw, (fan_in, fan_out), jnp.float32, -bound, bound)
        b = jax.random.uniform(kb, (fan_out,), jnp.float32, -bound, bound)
        return w, b

    k1, k2 = jax.random.split(key)
    w1, b1 = linear(k1, input_dim, HIDDEN)
    w2, b2 = linear(k2, HIDDEN, output_dim)
    return (w1, b1, w2, b2)


def prepare_params(params):
    """One-time conversion into kernel layout: bf16 weights, biases as (1, N)
    f32 rows, output dim zero-padded up to a multiple of 128 (lane-dense)."""
    w1, b1, w2, b2 = params
    out_dim = w2.shape[1]
    out_pad = _round_up(max(out_dim, LANE), LANE)
    pad = out_pad - out_dim
    return dict(
        w1=w1.astype(jnp.bfloat16),
        b1=b1.reshape(1, -1).astype(jnp.float32),
        w2=jnp.pad(w2, ((0, 0), (0, pad))).astype(jnp.bfloat16),
        b2=jnp.pad(b2, ((0, pad),)).reshape(1, -1).astype(jnp.float32),
        out_dim=out_dim,
    )


def policy_forward(x, prep, *, block_b=256):
    w1, b1, w2, b2 = prep["w1"], prep["b1"], prep["w2"], prep["b2"]
    out_dim = prep["out_dim"]
    B, in_dim = x.shape
    hidden = w1.shape[1]
    out_pad = w2.shape[1]

    # Batch tiling: whole batch if small, otherwise block_b-sized tiles
    # (batch padded up so every tile is full; padded rows sliced off below).
    if B <= block_b:
        tb, Bp = B, B
    else:
        tb = block_b
        Bp = _round_up(B, tb)
    if Bp != B:
        x = jnp.pad(x, ((0, Bp - B), (0, 0)))
    grid = (Bp // tb,)

    # VMEM budget derived from the actual working set (double-buffered I/O +
    # resident weights + activations), clamped well under v7x's 64 MiB.
    weight_bytes = (in_dim * hidden + hidden * out_pad) * 2 + (hidden + out_pad) * 4
    io_bytes = tb * (in_dim + out_pad) * 4
    act_bytes = tb * hidden * 4
    vmem_limit = int(min(max(4 * (weight_bytes + io_bytes) + 2 * act_bytes, 4 << 20),
                         48 << 20))

    flops = int(2 * Bp * (in_dim * hidden + hidden * out_pad))
    bytes_accessed = int(weight_bytes + Bp * (in_dim + out_pad) * 4)

    out = pl.pallas_call(
        policy_kernel,
        out_shape=jax.ShapeDtypeStruct((Bp, out_pad), jnp.float32),
        grid=grid,
        in_specs=[
            pl.BlockSpec((tb, in_dim), lambda i: (i, 0)),       # x: tiled over batch
            pl.BlockSpec((in_dim, hidden), lambda i: (0, 0)),   # W1: resident
            pl.BlockSpec((1, hidden), lambda i: (0, 0)),        # b1: resident
            pl.BlockSpec((hidden, out_pad), lambda i: (0, 0)),  # W2: resident
            pl.BlockSpec((1, out_pad), lambda i: (0, 0)),       # b2: resident
        ],
        out_specs=pl.BlockSpec((tb, out_pad), lambda i: (i, 0)),
        compiler_params=pltpu.CompilerParams(
            dimension_semantics=("parallel",),
            vmem_limit_bytes=vmem_limit,
        ),
        cost_estimate=pl.CostEstimate(
            flops=flops, transcendentals=0, bytes_accessed=bytes_accessed),
    )(x, w1, b1, w2, b2)

    # Narrow the lane-dense padded output back to the true logits shape.
    return out[:B, :out_dim]


def policy_reference(x, params):
    """Pure-JAX f32 reference of the PyTorch forward pass."""
    w1, b1, w2, b2 = params
    h1 = jax.nn.relu(x @ w1 + b1)
    return h1 @ w2 + b2


if __name__ == "__main__":
    B, input_dim, output_dim = 2, 32, 8

    key = jax.random.PRNGKey(0)
    kx, kp = jax.random.split(key)
    x = jax.random.normal(kx, (B, input_dim), jnp.float32)

    params = init_params(kp, input_dim, output_dim)
    prep = prepare_params(params)   # bf16 cast + padding done once, not per call

    logits = policy_forward(x, prep)
    logits = jax.block_until_ready(logits)

    ref = policy_reference(x, params)
    assert logits.shape == (B, output_dim), logits.shape
    # bf16 weights vs f32 reference -> loosened tolerance (f32 accumulation kept)
    assert jnp.allclose(logits, ref, atol=5e-2, rtol=5e-2), (logits, ref)

    print("KERNEL_OK")
</pallas_src>

<mosaic_0001>
module attributes {stable_mosaic.version = 11 : i64} {
  func.func @policy_kernel(%arg0: i32, %arg1: memref<2x32xf32, #tpu.memory_space<vmem>>, %arg2: memref<32x256xbf16, #tpu.memory_space<vmem>>, %arg3: memref<1x256xf32, #tpu.memory_space<vmem>>, %arg4: memref<256x128xbf16, #tpu.memory_space<vmem>>, %arg5: memref<1x128xf32, #tpu.memory_space<vmem>>, %arg6: memref<2x128xf32, #tpu.memory_space<vmem>>) attributes {dimension_semantics = [#tpu.dimension_semantics<parallel>], iteration_bounds = array<i64: 1>, scalar_prefetch = 0 : i64, scratch_operands = 0 : i64, tpu.core_type = #tpu.core_type<tc>, window_params = [{transform_indices = @transform_0, window_bounds = array<i64: 2, 32>}, {pipeline_mode = #tpu.pipeline_mode<synchronous>, transform_indices = @transform_1, window_bounds = array<i64: 32, 256>}, {pipeline_mode = #tpu.pipeline_mode<synchronous>, transform_indices = @transform_2, window_bounds = array<i64: 1, 256>}, {pipeline_mode = #tpu.pipeline_mode<synchronous>, transform_indices = @transform_3, window_bounds = array<i64: 256, 128>}, {pipeline_mode = #tpu.pipeline_mode<synchronous>, transform_indices = @transform_4, window_bounds = array<i64: 1, 128>}, {transform_indices = @transform_5, window_bounds = array<i64: 2, 128>}]} {
    %c0 = arith.constant 0 : index
    %c0_0 = arith.constant 0 : index
    %0 = vector.load %arg1[%c0, %c0_0] : memref<2x32xf32, #tpu.memory_space<vmem>>, vector<2x32xf32>
    %1 = arith.truncf %0 : vector<2x32xf32> to vector<2x32xbf16>
    %c0_1 = arith.constant 0 : index
    %c0_2 = arith.constant 0 : index
    %2 = vector.load %arg2[%c0_1, %c0_2] : memref<32x256xbf16, #tpu.memory_space<vmem>>, vector<32x256xbf16>
    %cst = arith.constant dense<0.000000e+00> : vector<2x256xf32>
    %3 = tpu.matmul %1, %2, %cst {dimension_numbers = #tpu.dot_dimension_numbers<[1], [0], [0], [1], [0, 0, 1, 1], [], []>} : vector<2x32xbf16>, vector<32x256xbf16>, vector<2x256xf32> -> vector<2x256xf32>
    %c0_3 = arith.constant 0 : index
    %c0_4 = arith.constant 0 : index
    %4 = vector.load %arg3[%c0_3, %c0_4] : memref<1x256xf32, #tpu.memory_space<vmem>>, vector<1x256xf32>
    %5 = vector.broadcast %4 : vector<1x256xf32> to vector<2x256xf32>
    %6 = arith.addf %3, %5 : vector<2x256xf32>
    %cst_5 = arith.constant 0.000000e+00 : f32
    %7 = vector.broadcast %cst_5 : f32 to vector<2x256xf32>
    %8 = arith.maximumf %6, %7 : vector<2x256xf32>
    %9 = arith.truncf %8 : vector<2x256xf32> to vector<2x256xbf16>
    %c0_6 = arith.constant 0 : index
    %c0_7 = arith.constant 0 : index
    %10 = vector.load %arg4[%c0_6, %c0_7] : memref<256x128xbf16, #tpu.memory_space<vmem>>, vector<256x128xbf16>
    %cst_8 = arith.constant dense<0.000000e+00> : vector<2x128xf32>
    %11 = tpu.matmul %9, %10, %cst_8 {dimension_numbers = #tpu.dot_dimension_numbers<[1], [0], [0], [1], [0, 0, 1, 1], [], []>} : vector<2x256xbf16>, vector<256x128xbf16>, vector<2x128xf32> -> vector<2x128xf32>
    %c0_9 = arith.constant 0 : index
    %c0_10 = arith.constant 0 : index
    %12 = vector.load %arg5[%c0_9, %c0_10] : memref<1x128xf32, #tpu.memory_space<vmem>>, vector<1x128xf32>
    %13 = vector.broadcast %12 : vector<1x128xf32> to vector<2x128xf32>
    %14 = arith.addf %11, %13 : vector<2x128xf32>
    %c0_11 = arith.constant 0 : index
    %c0_12 = arith.constant 0 : index
    %15 = vector.load %arg6[%c0_11, %c0_12] : memref<2x128xf32, #tpu.memory_space<vmem>>, vector<2x128xf32>
    tpu.vector_store %arg6[%c0_11, %c0_12], %14 {strides = array<i32>} : memref<2x128xf32, #tpu.memory_space<vmem>>, vector<2x128xf32>,
    return
  }
  func.func @transform_0(%arg0: i32) -> (i32, i32) {
    %c0_i32 = arith.constant 0 : i32
    %c0_i32_0 = arith.constant 0 : i32
    return %arg0, %c0_i32 : i32, i32
  }
  func.func @transform_1(%arg0: i32) -> (i32, i32) {
    %c0_i32 = arith.constant 0 : i32
    %c0_i32_0 = arith.constant 0 : i32
    %c0_i32_1 = arith.constant 0 : i32
    return %c0_i32, %c0_i32_0 : i32, i32
  }
  func.func @transform_2(%arg0: i32) -> (i32, i32) {
    %c0_i32 = arith.constant 0 : i32
    %c0_i32_0 = arith.constant 0 : i32
    %c0_i32_1 = arith.constant 0 : i32
    return %c0_i32, %c0_i32_0 : i32, i32
  }
  func.func @transform_3(%arg0: i32) -> (i32, i32) {
    %c0_i32 = arith.constant 0 : i32
    %c0_i32_0 = arith.constant 0 : i32
    %c0_i32_1 = arith.constant 0 : i32
    return %c0_i32, %c0_i32_0 : i32, i32
  }
  func.func @transform_4(%arg0: i32) -> (i32, i32) {
    %c0_i32 = arith.constant 0 : i32
    %c0_i32_0 = arith.constant 0 : i32
    %c0_i32_1 = arith.constant 0 : i32
    return %c0_i32, %c0_i32_0 : i32, i32
  }
  func.func @transform_5(%arg0: i32) -> (i32, i32) {
    %c0_i32 = arith.constant 0 : i32
    %c0_i32_0 = arith.constant 0 : i32
    return %arg0, %c0_i32 : i32, i32
  }
}

</mosaic_0001>

<llo_original>
// kernel: tpu_custom_call.1
$region0: #{tpu_custom_call.1}
  #allocation0 [shape = 'u32[]', space=smem, size = 0x4, offset = 0x4, fixed_abs, tag = 'smem constant byte address 0x4 - core index']
  #allocation1 [shape = 'u32[72,128]{1,0:T(1,128)}', space=vmem, size = 0x9000, scoped, tag = 'internal scratch']
  %s0 = inlined_call_operand.hbm [shape: f32[2,32], index: 0, kind: input, shape index: {}]
  %s1 = inlined_call_operand.hbm [shape: bf16[32,256], index: 1, kind: input, shape index: {}]
  %s2 = inlined_call_operand.hbm [shape: f32[1,256], index: 2, kind: input, shape index: {}]
  %s3 = inlined_call_operand.hbm [shape: bf16[256,128], index: 3, kind: input, shape index: {}]
  %s4 = inlined_call_operand.vmem [shape: f32[1,128], index: 4, kind: input, shape index: {}]
  %s5 = inlined_call_operand.hbm [shape: f32[2,128], index: 5, kind: output, shape index: {}]
  %s6 = sld [smem:[#allocation0]]
  $region46: #{tpu_custom_call.1} parent=0
    _
  %s8 = ssub.s32 1, %s6
  %s9 = scalar_select 0, %s8, %s6
  $region1: #{tpu_custom_call.1} parent=0
    #allocation2 [shape = 'u8[1024]{0}', space=vmem, size = 0x400, scoped, tag = 'input window, operand 0, single buffered']
    #allocation3 [shape = 's32[1]{0}', space=sflag, size = 0x4, scoped, tag = 'scoped memory for tpu_custom_call.1']
    #allocation4 [shape = 's32[1]{0}', space=sflag, size = 0x4, scoped, tag = 'scoped memory for tpu_custom_call.1']
    #allocation5 [shape = 'u8[16384]{0}', space=vmem, size = 0x4000, scoped, tag = 'input window, operand 1, single buffered']
    #allocation6 [shape = 's32[1]{0}', space=sflag, size = 0x4, scoped, tag = 'scoped memory for tpu_custom_call.1']
    #allocation7 [shape = 'u8[1024]{0}', space=vmem, size = 0x400, scoped, tag = 'input window, operand 2, single buffered']
    #allocation8 [shape = 'u8[65536]{0}', space=vmem, size = 0x10000, scoped, tag = 'input window, operand 3, single buffered']
    #allocation9 [shape = 's32[1]{0}', space=sflag, size = 0x4, scoped, tag = 'scoped memory for tpu_custom_call.1']
    #allocation10 [shape = 'u8[1024]{0}', space=vmem, size = 0x400, scoped, tag = 'output window, operand 0, single buffered']
    %10 = vsyncpa [#allocation3], 0
    %11 = vsyncpa [#allocation6], 0
    %12 = vsyncpa [#allocation9], 0
    %13 = vsyncpa [#allocation4], 0
    // Predicated region
    $region2: #{tpu_custom_call.1} parent=1 // pred_check
      _
    $region3: #{tpu_custom_call.1} parent=1 // pred_check_branch
      %15 = sbr.rel (0) target = $region5
    $region4: #{tpu_custom_call.1} parent=1 // pred_region
      %17 = vsyncadd [#allocation3], 0
      %s19 = sshll.u32 %s0, 4
      %s20 = int_to_ptr.hbm [resolvable:$true] %s19
      %s21 = sshll.u32 [#allocation2], 4
      %s22 = int_to_ptr.vmem [resolvable:$true] %s21
      %24 = dma.hbm_to_vmem [thread:$0]  %s20, 32, %s22, [#allocation3]
    $region5: #{tpu_custom_call.1} parent=1 // pred_fallthru
      _
    // Predicated region
    $region6: #{tpu_custom_call.1} parent=1 // pred_check
      _
    $region7: #{tpu_custom_call.1} parent=1 // pred_check_branch
      %26 = sbr.rel (0) target = $region9
    $region8: #{tpu_custom_call.1} parent=1 // pred_region
      %28 = vsyncadd [#allocation6], 0
      %s29 = sshll.u32 %s1, 4
      %s30 = int_to_ptr.hbm [resolvable:$true] %s29
      %s31 = sshll.u32 [#allocation5], 4
      %s32 = int_to_ptr.vmem [resolvable:$true] %s31
      %37 = dma.hbm_to_vmem [thread:$0]  %s30, 512, %s32, [#allocation6], 128, 128, 8
    $region9: #{tpu_custom_call.1} parent=1 // pred_fallthru
      _
    // Predicated region
    $region10: #{tpu_custom_call.1} parent=1 // pred_check
      _
    $region11: #{tpu_custom_call.1} parent=1 // pred_check_branch
      %39 = sbr.rel (0) target = $region13
    $region12: #{tpu_custom_call.1} parent=1 // pred_region
      %41 = vsyncadd [#allocation6], 0
      %s43 = sshll.u32 %s2, 4
      %s44 = int_to_ptr.hbm [resolvable:$true] %s43
      %s45 = sshll.u32 [#allocation7], 4
      %s46 = int_to_ptr.vmem [resolvable:$true] %s45
      %48 = dma.hbm_to_vmem [thread:$0]  %s44, 32, %s46, [#allocation6]
    $region13: #{tpu_custom_call.1} parent=1 // pred_fallthru
      _
    // Predicated region
    $region14: #{tpu_custom_call.1} parent=1 // pred_check
      _
    $region15: #{tpu_custom_call.1} parent=1 // pred_check_branch
      %50 = sbr.rel (0) target = $region17
    $region16: #{tpu_custom_call.1} parent=1 // pred_region
      %52 = vsyncadd [#allocation9], 0
      %s53 = sshll.u32 %s3, 4
      %s54 = int_to_ptr.hbm [resolvable:$true] %s53
      %s55 = sshll.u32 [#allocation8], 4
      %s56 = int_to_ptr.vmem [resolvable:$true] %s55
      %61 = dma.hbm_to_vmem [thread:$0]  %s54, 2048, %s56, [#allocation9], 64, 64, 4
    $region17: #{tpu_custom_call.1} parent=1 // pred_fallthru
      _
    // Predicated region
    $region18: #{tpu_custom_call.1} parent=1 // pred_check
      _
    $region19: #{tpu_custom_call.1} parent=1 // pred_check_branch
      %63 = sbr.rel (0) target = $region21
    $region20: #{tpu_custom_call.1} parent=1 // pred_region
      _
    $region21: #{tpu_custom_call.1} parent=1 // pred_fallthru
      _
    // Predicated region
    $region22: #{tpu_custom_call.1} parent=1 // pred_check
      _
    $region23: #{tpu_custom_call.1} parent=1 // pred_check_branch
      %65 = sbr.rel (0) target = $region25
    $region24: #{tpu_custom_call.1} parent=1 // pred_region
      %67 = dma.done [#allocation3], 32
    $region25: #{tpu_custom_call.1} parent=1 // pred_fallthru
      _
    // Predicated region
    $region26: #{tpu_custom_call.1} parent=1 // pred_check
      _
    $region27: #{tpu_custom_call.1} parent=1 // pred_check_branch
      %69 = sbr.rel (0) target = $region29
    $region28: #{tpu_custom_call.1} parent=1 // pred_region
      %71 = dma.done [#allocation6], 512
    $region29: #{tpu_custom_call.1} parent=1 // pred_fallthru
      _
    // Predicated region
    $region30: #{tpu_custom_call.1} parent=1 // pred_check
      _
    $region31: #{tpu_custom_call.1} parent=1 // pred_check_branch
      %73 = sbr.rel (0) target = $region33
    $region32: #{tpu_custom_call.1} parent=1 // pred_region
      %75 = dma.done [#allocation6], 32
    $region33: #{tpu_custom_call.1} parent=1 // pred_fallthru
      _
    // Predicated region
    $region34: #{tpu_custom_call.1} parent=1 // pred_check
      _
    $region35: #{tpu_custom_call.1} parent=1 // pred_check_branch
      %77 = sbr.rel (0) target = $region37
    $region36: #{tpu_custom_call.1} parent=1 // pred_region
      %79 = dma.done [#allocation9], 2048
    $region37: #{tpu_custom_call.1} parent=1 // pred_fallthru
      _
    %v81 = vld [vmem:[#allocation2] sm:$0x3]
    %v82 = vpack.c.bf16 %v81, %v81
    %v83 = vld [vmem:[#allocation5] sm:$0xff]
    %v84 = vld [vmem:[#allocation5 + $0x8] sm:$0xff]
    %v85 = vld [vmem:[#allocation5 + $0x10] sm:$0xff]
    %v86 = vld [vmem:[#allocation5 + $0x18] sm:$0xff]
    %v87 = vld [vmem:[#allocation7] sm:$0x3]
    %v89 = vperm.slane %v87, 0
    %v90 = vperm.slane %v87, 1
    %v97 = vunpack.c.l.b16 %v83
    %v98 = vunpack.c.h.b16 %v83
    %v99 = vunpack.c.l.b16 %v84
    %v100 = vunpack.c.h.b16 %v84
    %v101 = vunpack.c.l.b16 %v85
    %v102 = vunpack.c.h.b16 %v85
    %v103 = vunpack.c.l.b16 %v86
    %v104 = vunpack.c.h.b16 %v86
    %v105 = vpack.c.b16 %v99, %v97
    %v106 = vpack.c.b16 %v100, %v98
    %v107 = vpack.c.b16 %v103, %v101
    %v108 = vpack.c.b16 %v104, %v102
    %vm113 = vcmask 261120
    %v115 = vsel %vm113, %v82, 0
    %117 = vmatpush.bf16.msra.mxu0 0
    %118 = vmatpush.bf16.msra.mxu0 0
    %119 = vmatpush.bf16.msra.mxu0 0
    %120 = vmatpush.bf16.msra.mxu0 0
    %121 = vmatpush.bf16.msra.mxu0 0
    %122 = vmatpush.bf16.msra.mxu0 0
    %123 = vmatpush.bf16.msra.mxu0 %v107
    %124 = vmatpush.bf16.msra.mxu0 %v105
    %125 = vmatmul.bf16.gmra.mxu0 %v115
    %v126 = vpop.f32.mrf.mxu0
    %v127 = vadd.f32 %v89, %v126
    %v128 = vpop.f32.mrf.mxu0
    %129 = vdwg.mxu0
    %130 = vmatpush.bf16.msra.mxu0 0
    %131 = vmatpush.bf16.msra.mxu0 0
    %132 = vmatpush.bf16.msra.mxu0 0
    %133 = vmatpush.bf16.msra.mxu0 0
    %134 = vmatpush.bf16.msra.mxu0 0
    %135 = vmatpush.bf16.msra.mxu0 0
    %136 = vmatpush.bf16.msra.mxu0 %v108
    %137 = vmatpush.bf16.msra.mxu0 %v106
    %138 = vmatmul.bf16.gmra.mxu0 %v115
    %v139 = vpop.f32.mrf.mxu0
    %v140 = vadd.f32 %v90, %v139
    %v141 = vpop.f32.mrf.mxu0
    %142 = vdwg.mxu0
    %v143 = vmax.f32 %v127, 0.0
    %v144 = vmax.f32 %v140, 0.0
    %v145 = vpack.c.bf16 %v143, %v143
    %v146 = vpack.c.bf16 %v144, %v144
    %v147 = vld [vmem:[#allocation8] sm:$0xf]
    %v148 = vld [vmem:[#allocation8 + $0x4] sm:$0xf]
    %v149 = vld [vmem:[#allocation8 + $0x8] sm:$0xf]
    %v150 = vld [vmem:[#allocation8 + $0xc] sm:$0xf]
    %v151 = vld [vmem:[#allocation8 + $0x10] sm:$0xf]
    %v152 = vld [vmem:[#allocation8 + $0x14] sm:$0xf]
    %v153 = vld [vmem:[#allocation8 + $0x18] sm:$0xf]
    %v154 = vld [vmem:[#allocation8 + $0x1c] sm:$0xf]
    %v155 = vld [vmem:[#allocation8 + $0x20] sm:$0xf]
    %v156 = vld [vmem:[#allocation8 + $0x24] sm:$0xf]
    %v157 = vld [vmem:[#allocation8 + $0x28] sm:$0xf]
    %v158 = vld [vmem:[#allocation8 + $0x2c] sm:$0xf]
    %v159 = vld [vmem:[#allocation8 + $0x30] sm:$0xf]
    %v160 = vld [vmem:[#allocation8 + $0x34] sm:$0xf]
    %v161 = vld [vmem:[#allocation8 + $0x38] sm:$0xf]
    %v162 = vld [vmem:[#allocation8 + $0x3c] sm:$0xf]
    %v163 = vld [vmem:[#allocation8 + $0x40] sm:$0xf]
    %v164 = vld [vmem:[#allocation8 + $0x44] sm:$0xf]
    %v165 = vld [vmem:[#allocation8 + $0x48] sm:$0xf]
    %v166 = vld [vmem:[#allocation8 + $0x4c] sm:$0xf]
    %v167 = vld [vmem:[#allocation8 + $0x50] sm:$0xf]
    %v168 = vld [vmem:[#allocation8 + $0x54] sm:$0xf]
    %v169 = vld [vmem:[#allocation8 + $0x58] sm:$0xf]
    %v170 = vld [vmem:[#allocation8 + $0x5c] sm:$0xf]
    %v171 = vld [vmem:[#allocation8 + $0x60] sm:$0xf]
    %v172 = vld [vmem:[#allocation8 + $0x64] sm:$0xf]
    %v173 = vld [vmem:[#allocation8 + $0x68] sm:$0xf]
    %v174 = vld [vmem:[#allocation8 + $0x6c] sm:$0xf]
    %v175 = vld [vmem:[#allocation8 + $0x70] sm:$0xf]
    %v176 = vld [vmem:[#allocation8 + $0x74] sm:$0xf]
    %v177 = vld [vmem:[#allocation8 + $0x78] sm:$0xf]
    %v178 = vld [vmem:[#allocation8 + $0x7c] sm:$0xf]
    %v179 = vld [vmem:[%s4] sm:$0x1]
    %v181 = vperm.slane %v179, 0
    %v215 = vunpack.c.l.b16 %v147
    %v216 = vunpack.c.l.b16 %v148
    %v217 = vunpack.c.l.b16 %v149
    %v218 = vunpack.c.l.b16 %v150
    %v219 = vunpack.c.l.b16 %v151
    %v220 = vunpack.c.l.b16 %v152
    %v221 = vunpack.c.l.b16 %v153
    %v222 = vunpack.c.l.b16 %v154
    %v223 = vunpack.c.l.b16 %v155
    %v224 = vunpack.c.l.b16 %v156
    %v225 = vunpack.c.l.b16 %v157
    %v226 = vunpack.c.l.b16 %v158
    %v227 = vunpack.c.l.b16 %v159
    %v228 = vunpack.c.l.b16 %v160
    %v229 = vunpack.c.l.b16 %v161
    %v230 = vunpack.c.l.b16 %v162
    %v231 = vunpack.c.l.b16 %v163
    %v232 = vunpack.c.l.b16 %v164
    %v233 = vunpack.c.l.b16 %v165
    %v234 = vunpack.c.l.b16 %v166
    %v235 = vunpack.c.l.b16 %v167
    %v236 = vunpack.c.l.b16 %v168
    %v237 = vunpack.c.l.b16 %v169
    %v238 = vunpack.c.l.b16 %v170
    %v239 = vunpack.c.l.b16 %v171
    %v240 = vunpack.c.l.b16 %v172
    %v241 = vunpack.c.l.b16 %v173
    %v242 = vunpack.c.l.b16 %v174
    %v243 = vunpack.c.l.b16 %v175
    %v244 = vunpack.c.l.b16 %v176
    %v245 = vunpack.c.l.b16 %v177
    %v246 = vunpack.c.l.b16 %v178
    %v247 = vpack.c.b16 %v216, %v215
    %v248 = vpack.c.b16 %v218, %v217
    %v249 = vpack.c.b16 %v220, %v219
    %v250 = vpack.c.b16 %v222, %v221
    %v251 = vpack.c.b16 %v224, %v223
    %v252 = vpack.c.b16 %v226, %v225
    %v253 = vpack.c.b16 %v228, %v227
    %v254 = vpack.c.b16 %v230, %v229
    %v255 = vpack.c.b16 %v232, %v231
    %v256 = vpack.c.b16 %v234, %v233
    %v257 = vpack.c.b16 %v236, %v235
    %v258 = vpack.c.b16 %v238, %v237
    %v259 = vpack.c.b16 %v240, %v239
    %v260 = vpack.c.b16 %v242, %v241
    %v261 = vpack.c.b16 %v244, %v243
    %v262 = vpack.c.b16 %v246, %v245
    %279 = vmatpush.bf16.msra.mxu0 %v254
    %280 = vmatpush.bf16.msra.mxu0 %v253
    %281 = vmatpush.bf16.msra.mxu0 %v252
    %282 = vmatpush.bf16.msra.mxu0 %v251
    %283 = vmatpush.bf16.msra.mxu0 %v250
    %284 = vmatpush.bf16.msra.mxu0 %v249
    %285 = vmatpush.bf16.msra.mxu0 %v248
    %286 = vmatpush.bf16.msra.mxu0 %v247
    %287 = vmatmul.bf16.gmra.mxu0 %v145
    %v288 = vpop.f32.mrf.mxu0
    %v289 = vadd.f32 %v181, %v288
    %v290 = vpop.f32.mrf.mxu0
    %291 = vdwg.mxu0
    %292 = vmatpush.bf16.msra.mxu0 %v262
    %293 = vmatpush.bf16.msra.mxu0 %v261
    %294 = vmatpush.bf16.msra.mxu0 %v260
    %295 = vmatpush.bf16.msra.mxu0 %v259
    %296 = vmatpush.bf16.msra.mxu0 %v258
    %297 = vmatpush.bf16.msra.mxu0 %v257
    %298 = vmatpush.bf16.msra.mxu0 %v256
    %299 = vmatpush.bf16.msra.mxu0 %v255
    %300 = vmatmul.bf16.gmra.mxu0 %v146
    %v301 = vpop.f32.mrf.mxu0
    %v302 = vadd.f32 %v289, %v301
    %v303 = vpop.f32.mrf.mxu0
    %304 = vdwg.mxu0
    %305 = vst [vmem:[#allocation10] sm:$0x3] %v302
    // Predicated region
    $region38: #{tpu_custom_call.1} parent=1 // pred_check
      _
    $region39: #{tpu_custom_call.1} parent=1 // pred_check_branch
      %307 = sbr.rel (0) target = $region41
    $region40: #{tpu_custom_call.1} parent=1 // pred_region
      %309 = vsyncadd [#allocation4], 0
      %s311 = sshll.u32 [#allocation10], 4
      %s312 = int_to_ptr.vmem [resolvable:$true] %s311
      %s313 = sshll.u32 %s5, 4
      %s314 = int_to_ptr.hbm [resolvable:$true] %s313
      %316 = dma.vmem_to_hbm [thread:$0]  %s312, 32, %s314, [#allocation4]
    $region41: #{tpu_custom_call.1} parent=1 // pred_fallthru
      _
    // Predicated region
    $region42: #{tpu_custom_call.1} parent=1 // pred_check
      _
    $region43: #{tpu_custom_call.1} parent=1 // pred_check_branch
      %318 = sbr.rel (0) target = $region45
    $region44: #{tpu_custom_call.1} parent=1 // pred_region
      %320 = dma.done [#allocation4], 32
    $region45: #{tpu_custom_call.1} parent=1 // pred_fallthru
      _
    %321 = vsyncpa [#allocation3], 1
    %322 = vsyncpa [#allocation6], 1
    %323 = vsyncpa [#allocation9], 1
    %324 = vsyncpa [#allocation4], 1

</llo_original>
